<compile_context>
chip_gen: v7x
topology: tpu7x:2x2x1
jax: 0.10.0
libtpu: 0.0.40
codegen_flags: <defaults>
</compile_context>

<pallas_src>
import math

import jax
import jax.numpy as jnp
from jax.experimental import pallas as pl
from jax.experimental.pallas import tpu as pltpu

_LANE = 128
_SUBL_BF16 = 16     # bf16 sublane packing: keep second-minor dims 16-aligned


def _round_up(x, m):
    return ((x + m - 1) // m) * m


def _pick_col_tile(cols_p):
    """Largest lane-dense column tile (<=512) that divides cols_p."""
    for t in (512, 256, 128):
        if cols_p % t == 0:
            return min(t, cols_p)
    return cols_p


# ---------------------------------------------------------------------------
# Kernel
# ---------------------------------------------------------------------------
def _mat_gru_cell_kernel(q_ref, w_stack_ref, uh_ref, b_stack_ref, out_ref):
    rows_p = out_ref.shape[0]

    q = q_ref[...]                                   # (rows_p, tc) f32
    q_bf = q.astype(jnp.bfloat16)

    # Fused MXU matmul for all three W-paths (f32 accumulate):
    #   [W_u+U_u ; W_r+U_r ; W_h] @ q  ->  (3*rows_p, tc)
    pre = jnp.dot(w_stack_ref[...], q_bf, preferred_element_type=jnp.float32)
    pre = pre + b_stack_ref[...].astype(jnp.float32)

    # sigmoid(x) == 0.5 * (tanh(0.5 * x) + 1)  -> single EUP op per element.
    update = 0.5 * (jnp.tanh(0.5 * pre[:rows_p]) + 1.0)
    reset = 0.5 * (jnp.tanh(0.5 * pre[rows_p:2 * rows_p]) + 1.0)

    # Second (and last) matmul: true data dependency on `reset`.
    # f32 multiply (portable to v5e), cast only for the MXU operand.
    h_in = (reset * q).astype(jnp.bfloat16)
    h_cap = jnp.tanh(
        pre[2 * rows_p:]
        + jnp.dot(uh_ref[...], h_in, preferred_element_type=jnp.float32)
    )

    # new_Q = (1 - update)*q + update*h_cap  ==  q + update*(h_cap - q)
    out_ref[...] = (q + update * (h_cap - q)).astype(out_ref.dtype)


# ---------------------------------------------------------------------------
# One-time packing (hoisted out of the step path)
# ---------------------------------------------------------------------------
def pack_params(params, rows, cols):
    """Pack/pad/cast weights once; reuse the result across every GRU step."""
    rows_p = _round_up(rows, _SUBL_BF16)
    cols_p = _round_up(cols, _LANE)
    pr = rows_p - rows
    pc = cols_p - cols

    def pad_w(w):                                    # (rows, rows) -> (rows_p, rows_p)
        return jnp.pad(w, ((0, pr), (0, pr)))

    def pad_b(b):                                    # (rows, cols) -> (rows_p, cols_p)
        return jnp.pad(b, ((0, pr), (0, pc)))

    w_stack = jnp.concatenate(
        [pad_w(params["W_u"] + params["U_u"]),
         pad_w(params["W_r"] + params["U_r"]),
         pad_w(params["W_h"])], axis=0).astype(jnp.bfloat16)   # (3*rows_p, rows_p)
    u_h = pad_w(params["U_h"]).astype(jnp.bfloat16)            # (rows_p, rows_p)
    b_stack = jnp.concatenate(
        [pad_b(params["b_u"]), pad_b(params["b_r"]),
         pad_b(params["b_h"])], axis=0).astype(jnp.bfloat16)   # (3*rows_p, cols_p)

    return {"w_stack": w_stack, "u_h": u_h, "b_stack": b_stack}


def pad_state(prev_Q, packed):
    """Pad prev_Q once to the packed (rows_p, cols_p) layout."""
    rows_p = packed["u_h"].shape[0]
    cols_p = packed["b_stack"].shape[1]
    rows, cols = prev_Q.shape
    return jnp.pad(prev_Q, ((0, rows_p - rows), (0, cols_p - cols)))


# ---------------------------------------------------------------------------
# Step on the padded state (recurrent-friendly: no per-step pack or slice)
# ---------------------------------------------------------------------------
def mat_gru_cell_packed(q_p, packed):
    w_stack = packed["w_stack"]
    u_h = packed["u_h"]
    b_stack = packed["b_stack"]

    rows_p = u_h.shape[0]
    cols_p = q_p.shape[1]
    tc = _pick_col_tile(cols_p)
    n_col_tiles = cols_p // tc

    cost = pl.CostEstimate(
        flops=2 * 4 * rows_p * rows_p * cols_p,      # (3*rows_p + rows_p) x rows_p x cols_p MACs
        transcendentals=3 * rows_p * cols_p,         # 3 tanh per output element
        bytes_accessed=(q_p.size * 4 + w_stack.size * 2 + u_h.size * 2
                        + b_stack.size * 2 + rows_p * cols_p * 4),
    )

    # VMEM budget: resident weights (x2 buffers) + double-buffered tiles
    # + generous headroom for the f32 `pre` intermediate.  Capped at 64 MiB
    # so the limit is valid on v7x (64 MiB physical) as well as v5e/v6e.
    w_bytes = (w_stack.size + u_h.size) * 2
    tile_bytes = rows_p * tc * 4 + 3 * rows_p * tc * 2 + rows_p * tc * 4
    scratch_bytes = 8 * rows_p * tc * 4
    vmem_est = 2 * w_bytes + 2 * tile_bytes + scratch_bytes
    vmem_limit = min(64 << 20, max(2 * vmem_est, 16 << 20))
    # TODO(synk): for rows_p and/or cols_p large enough that resident weights
    # overflow the 64 MiB v7x budget, also tile the 3*rows_p M axis.

    return pl.pallas_call(
        _mat_gru_cell_kernel,
        out_shape=jax.ShapeDtypeStruct((rows_p, cols_p), q_p.dtype),
        grid=(n_col_tiles,),
        in_specs=[
            pl.BlockSpec((rows_p, tc), lambda j: (0, j)),          # Q tile
            pl.BlockSpec((3 * rows_p, rows_p), lambda j: (0, 0)),  # weights (resident)
            pl.BlockSpec((rows_p, rows_p), lambda j: (0, 0)),      # U_h     (resident)
            pl.BlockSpec((3 * rows_p, tc), lambda j: (0, j)),      # bias tile (bf16)
        ],
        out_specs=pl.BlockSpec((rows_p, tc), lambda j: (0, j)),
        compiler_params=pltpu.CompilerParams(
            dimension_semantics=("parallel",),
            vmem_limit_bytes=vmem_limit,
        ),
        cost_estimate=cost,
    )(q_p, w_stack, u_h, b_stack)


# ---------------------------------------------------------------------------
# Single-shot convenience wrapper (matches the PyTorch module forward)
# ---------------------------------------------------------------------------
def mat_gru_cell(prev_Q, params):
    rows, cols = prev_Q.shape
    packed = pack_params(params, rows, cols)
    q_p = pad_state(prev_Q, packed)
    out_p = mat_gru_cell_packed(q_p, packed)
    return out_p[:rows, :cols]


# ---------------------------------------------------------------------------
# Init + pure-JAX reference
# ---------------------------------------------------------------------------
def init_params(key, rows, cols, dtype=jnp.float32):
    """Mirrors mat_GRU_gate.reset_param: W, U ~ U(-stdv, stdv) with
    stdv = 1/sqrt(rows); bias = zeros(rows, cols)."""
    stdv = 1.0 / math.sqrt(rows)
    keys = jax.random.split(key, 6)
    u = lambda k: jax.random.uniform(k, (rows, rows), dtype, -stdv, stdv)
    z = jnp.zeros((rows, cols), dtype)
    return {
        "W_u": u(keys[0]), "U_u": u(keys[1]), "b_u": z,
        "W_r": u(keys[2]), "U_r": u(keys[3]), "b_r": z,
        "W_h": u(keys[4]), "U_h": u(keys[5]), "b_h": z,
    }


def mat_gru_cell_ref(prev_Q, p):
    """Pure-JAX f32 reference for correctness checking."""
    q = prev_Q
    update = jax.nn.sigmoid(p["W_u"] @ q + p["U_u"] @ q + p["b_u"])
    reset = jax.nn.sigmoid(p["W_r"] @ q + p["U_r"] @ q + p["b_r"])
    h_cap = jnp.tanh(p["W_h"] @ q + p["U_h"] @ (reset * q) + p["b_h"])
    return (1.0 - update) * prev_Q + update * h_cap


if __name__ == "__main__":
    rows, cols = 32, 16   # prev_Q is (rows, cols); W/U are (rows, rows)
    key = jax.random.PRNGKey(0)
    k_q, k_p = jax.random.split(key)

    prev_Q = jax.random.normal(k_q, (rows, cols), jnp.float32)
    params = init_params(k_p, rows, cols)

    # --- single step (module forward semantics) ---
    new_Q = jax.jit(mat_gru_cell)(prev_Q, params)
    jax.block_until_ready(new_Q)
    ref = mat_gru_cell_ref(prev_Q, params)
    assert new_Q.shape == (rows, cols)
    err1 = float(jnp.max(jnp.abs(new_Q - ref)))
    # bf16 matmul operands (f32 accumulate / epilogue) => ~1e-2-level match.
    assert jnp.allclose(new_Q, ref, atol=2e-2, rtol=2e-2), err1

    # --- recurrent use: pack ONCE, keep the state padded across steps ---
    n_steps = 3
    packed = jax.jit(pack_params, static_argnums=(1, 2))(params, rows, cols)
    step = jax.jit(mat_gru_cell_packed)
    q_p = pad_state(prev_Q, packed)
    for _ in range(n_steps):
        q_p = step(q_p, packed)
    jax.block_until_ready(q_p)
    multi = q_p[:rows, :cols]

    qr = prev_Q
    for _ in range(n_steps):
        qr = mat_gru_cell_ref(qr, params)
    err2 = float(jnp.max(jnp.abs(multi - qr)))
    assert jnp.allclose(multi, qr, atol=5e-2, rtol=5e-2), err2

    print("KERNEL_OK")
</pallas_src>

<mosaic_0001>
module attributes {stable_mosaic.version = 11 : i64} {
  func.func @_mat_gru_cell_kernel(%arg0: i32, %arg1: memref<32x128xf32, #tpu.memory_space<vmem>>, %arg2: memref<96x32xbf16, #tpu.memory_space<vmem>>, %arg3: memref<32x32xbf16, #tpu.memory_space<vmem>>, %arg4: memref<96x128xbf16, #tpu.memory_space<vmem>>, %arg5: memref<32x128xf32, #tpu.memory_space<vmem>>) attributes {dimension_semantics = [#tpu.dimension_semantics<parallel>], iteration_bounds = array<i64: 1>, scalar_prefetch = 0 : i64, scratch_operands = 0 : i64, tpu.core_type = #tpu.core_type<tc>, window_params = [{transform_indices = @transform_0, window_bounds = array<i64: 32, 128>}, {pipeline_mode = #tpu.pipeline_mode<synchronous>, transform_indices = @transform_1, window_bounds = array<i64: 96, 32>}, {pipeline_mode = #tpu.pipeline_mode<synchronous>, transform_indices = @transform_2, window_bounds = array<i64: 32, 32>}, {transform_indices = @transform_3, window_bounds = array<i64: 96, 128>}, {transform_indices = @transform_4, window_bounds = array<i64: 32, 128>}]} {
    %c0 = arith.constant 0 : index
    %c0_0 = arith.constant 0 : index
    %0 = vector.load %arg1[%c0, %c0_0] : memref<32x128xf32, #tpu.memory_space<vmem>>, vector<32x128xf32>
    %1 = arith.truncf %0 : vector<32x128xf32> to vector<32x128xbf16>
    %c0_1 = arith.constant 0 : index
    %c0_2 = arith.constant 0 : index
    %2 = vector.load %arg2[%c0_1, %c0_2] : memref<96x32xbf16, #tpu.memory_space<vmem>>, vector<96x32xbf16>
    %cst = arith.constant dense<0.000000e+00> : vector<96x128xf32>
    %3 = tpu.matmul %2, %1, %cst {dimension_numbers = #tpu.dot_dimension_numbers<[1], [0], [0], [1], [0, 0, 1, 1], [], []>} : vector<96x32xbf16>, vector<32x128xbf16>, vector<96x128xf32> -> vector<96x128xf32>
    %c0_3 = arith.constant 0 : index
    %c0_4 = arith.constant 0 : index
    %4 = vector.load %arg4[%c0_3, %c0_4] : memref<96x128xbf16, #tpu.memory_space<vmem>>, vector<96x128xbf16>
    %5 = arith.extf %4 : vector<96x128xbf16> to vector<96x128xf32>
    %6 = arith.addf %3, %5 : vector<96x128xf32>
    %7 = vector.extract_strided_slice %6 {offsets = [0, 0], sizes = [32, 128], strides = [1, 1]} : vector<96x128xf32> to vector<32x128xf32>
    %cst_5 = arith.constant 5.000000e-01 : f32
    %8 = vector.broadcast %cst_5 : f32 to vector<32x128xf32>
    %9 = arith.mulf %8, %7 : vector<32x128xf32>
    %10 = math.tanh %9 : vector<32x128xf32>
    %cst_6 = arith.constant 1.000000e+00 : f32
    %11 = vector.broadcast %cst_6 : f32 to vector<32x128xf32>
    %12 = arith.addf %10, %11 : vector<32x128xf32>
    %cst_7 = arith.constant 5.000000e-01 : f32
    %13 = vector.broadcast %cst_7 : f32 to vector<32x128xf32>
    %14 = arith.mulf %13, %12 : vector<32x128xf32>
    %15 = vector.extract_strided_slice %6 {offsets = [32, 0], sizes = [32, 128], strides = [1, 1]} : vector<96x128xf32> to vector<32x128xf32>
    %cst_8 = arith.constant 5.000000e-01 : f32
    %16 = vector.broadcast %cst_8 : f32 to vector<32x128xf32>
    %17 = arith.mulf %16, %15 : vector<32x128xf32>
    %18 = math.tanh %17 : vector<32x128xf32>
    %cst_9 = arith.constant 1.000000e+00 : f32
    %19 = vector.broadcast %cst_9 : f32 to vector<32x128xf32>
    %20 = arith.addf %18, %19 : vector<32x128xf32>
    %cst_10 = arith.constant 5.000000e-01 : f32
    %21 = vector.broadcast %cst_10 : f32 to vector<32x128xf32>
    %22 = arith.mulf %21, %20 : vector<32x128xf32>
    %23 = arith.mulf %22, %0 : vector<32x128xf32>
    %24 = arith.truncf %23 : vector<32x128xf32> to vector<32x128xbf16>
    %25 = vector.extract_strided_slice %6 {offsets = [64, 0], sizes = [32, 128], strides = [1, 1]} : vector<96x128xf32> to vector<32x128xf32>
    %c0_11 = arith.constant 0 : index
    %c0_12 = arith.constant 0 : index
    %26 = vector.load %arg3[%c0_11, %c0_12] : memref<32x32xbf16, #tpu.memory_space<vmem>>, vector<32x32xbf16>
    %cst_13 = arith.constant dense<0.000000e+00> : vector<32x128xf32>
    %27 = tpu.matmul %26, %24, %cst_13 {dimension_numbers = #tpu.dot_dimension_numbers<[1], [0], [0], [1], [0, 0, 1, 1], [], []>} : vector<32x32xbf16>, vector<32x128xbf16>, vector<32x128xf32> -> vector<32x128xf32>
    %28 = arith.addf %25, %27 : vector<32x128xf32>
    %29 = math.tanh %28 : vector<32x128xf32>
    %30 = arith.subf %29, %0 : vector<32x128xf32>
    %31 = arith.mulf %14, %30 : vector<32x128xf32>
    %32 = arith.addf %0, %31 : vector<32x128xf32>
    %c0_14 = arith.constant 0 : index
    %c0_15 = arith.constant 0 : index
    %33 = vector.load %arg5[%c0_14, %c0_15] : memref<32x128xf32, #tpu.memory_space<vmem>>, vector<32x128xf32>
    tpu.vector_store %arg5[%c0_14, %c0_15], %32 {strides = array<i32>} : memref<32x128xf32, #tpu.memory_space<vmem>>, vector<32x128xf32>,
    return
  }
  func.func @transform_0(%arg0: i32) -> (i32, i32) {
    %c0_i32 = arith.constant 0 : i32
    %c0_i32_0 = arith.constant 0 : i32
    return %c0_i32, %arg0 : i32, i32
  }
  func.func @transform_1(%arg0: i32) -> (i32, i32) {
    %c0_i32 = arith.constant 0 : i32
    %c0_i32_0 = arith.constant 0 : i32
    %c0_i32_1 = arith.constant 0 : i32
    return %c0_i32, %c0_i32_0 : i32, i32
  }
  func.func @transform_2(%arg0: i32) -> (i32, i32) {
    %c0_i32 = arith.constant 0 : i32
    %c0_i32_0 = arith.constant 0 : i32
    %c0_i32_1 = arith.constant 0 : i32
    return %c0_i32, %c0_i32_0 : i32, i32
  }
  func.func @transform_3(%arg0: i32) -> (i32, i32) {
    %c0_i32 = arith.constant 0 : i32
    %c0_i32_0 = arith.constant 0 : i32
    return %c0_i32, %arg0 : i32, i32
  }
  func.func @transform_4(%arg0: i32) -> (i32, i32) {
    %c0_i32 = arith.constant 0 : i32
    %c0_i32_0 = arith.constant 0 : i32
    return %c0_i32, %arg0 : i32, i32
  }
}

</mosaic_0001>

<llo_original>
// kernel: mat_gru_cell.1
$region0: #{mat_gru_cell.1}
  #allocation0 [shape = 'u32[]', space=smem, size = 0x4, offset = 0x4, fixed_abs, tag = 'smem constant byte address 0x4 - core index']
  #allocation1 [shape = 'u32[144,128]{1,0:T(1,128)}', space=vmem, size = 0x12000, scoped, tag = 'internal scratch']
  %s0 = inlined_call_operand.vmem [shape: f32[32,128], index: 0, kind: input, shape index: {}]
  %s1 = inlined_call_operand.vmem [shape: bf16[96,32], index: 1, kind: input, shape index: {}]
  %s2 = inlined_call_operand.vmem [shape: bf16[32,32], index: 2, kind: input, shape index: {}]
  %s3 = inlined_call_operand.vmem [shape: bf16[96,128], index: 3, kind: input, shape index: {}]
  %s4 = inlined_call_operand.vmem [shape: f32[32,128], index: 4, kind: output, shape index: {}]
  %s5 = sld [smem:[#allocation0]]
  $region26: #{mat_gru_cell.1} parent=0
    _
  %s7 = ssub.s32 1, %s5
  %s8 = scalar_select 0, %s7, %s5
  // Predicated region
  $region2: #{mat_gru_cell.1} parent=0 // pred_check
    _
  $region3: #{mat_gru_cell.1} parent=0 // pred_check_branch
    %10 = sbr.rel (0) target = $region5
  $region4: #{mat_gru_cell.1} parent=0 // pred_region
    _
  $region5: #{mat_gru_cell.1} parent=0 // pred_fallthru
    _
  // Predicated region
  $region6: #{mat_gru_cell.1} parent=0 // pred_check
    _
  $region7: #{mat_gru_cell.1} parent=0 // pred_check_branch
    %12 = sbr.rel (0) target = $region9
  $region8: #{mat_gru_cell.1} parent=0 // pred_region
    _
  $region9: #{mat_gru_cell.1} parent=0 // pred_fallthru
    _
  // Predicated region
  $region10: #{mat_gru_cell.1} parent=0 // pred_check
    _
  $region11: #{mat_gru_cell.1} parent=0 // pred_check_branch
    %14 = sbr.rel (0) target = $region13
  $region12: #{mat_gru_cell.1} parent=0 // pred_region
    _
  $region13: #{mat_gru_cell.1} parent=0 // pred_fallthru
    _
  // Predicated region
  $region14: #{mat_gru_cell.1} parent=0 // pred_check
    _
  $region15: #{mat_gru_cell.1} parent=0 // pred_check_branch
    %16 = sbr.rel (0) target = $region17
  $region16: #{mat_gru_cell.1} parent=0 // pred_region
    _
  $region17: #{mat_gru_cell.1} parent=0 // pred_fallthru
    _
  %v18 = vld [vmem:[%s0] sm:$0xff]
  %v19 = vld [vmem:[%s0 + $0x8] sm:$0xff]
  %v20 = vld [vmem:[%s0 + $0x10] sm:$0xff]
  %v21 = vld [vmem:[%s0 + $0x18] sm:$0xff]
  %v22 = vpack.c.bf16 %v19, %v18
  %v23 = vpack.c.bf16 %v21, %v20
  %v24 = vld [vmem:[%s1] sm:$0xf]
  %v25 = vld [vmem:[%s1 + $0x4] sm:$0xf]
  %v26 = vld [vmem:[%s1 + $0x8] sm:$0xf]
  %v27 = vld [vmem:[%s1 + $0xc] sm:$0xf]
  %v28 = vld [vmem:[%s1 + $0x10] sm:$0xf]
  %v29 = vld [vmem:[%s1 + $0x14] sm:$0xf]
  %v30 = vld [vmem:[%s1 + $0x18] sm:$0xf]
  %v31 = vld [vmem:[%s1 + $0x1c] sm:$0xf]
  %v32 = vld [vmem:[%s1 + $0x20] sm:$0xf]
  %v33 = vld [vmem:[%s1 + $0x24] sm:$0xf]
  %v34 = vld [vmem:[%s1 + $0x28] sm:$0xf]
  %v35 = vld [vmem:[%s1 + $0x2c] sm:$0xf]
  %v36 = vld [vmem:[%s3] sm:$0xf]
  %v37 = vld [vmem:[%s3 + $0x4] sm:$0xf]
  %v38 = vld [vmem:[%s3 + $0x8] sm:$0xf]
  %v39 = vld [vmem:[%s3 + $0xc] sm:$0xf]
  %v40 = vld [vmem:[%s3 + $0x10] sm:$0xf]
  %v41 = vld [vmem:[%s3 + $0x14] sm:$0xf]
  %v42 = vld [vmem:[%s3 + $0x18] sm:$0xf]
  %v43 = vld [vmem:[%s3 + $0x1c] sm:$0xf]
  %v44 = vld [vmem:[%s3 + $0x20] sm:$0xf]
  %v45 = vld [vmem:[%s3 + $0x24] sm:$0xf]
  %v46 = vld [vmem:[%s3 + $0x28] sm:$0xf]
  %v47 = vld [vmem:[%s3 + $0x2c] sm:$0xf]
  %v48 = vunpack.c.l.bf16 %v36
  %v49 = vunpack.c.l.bf16 %v37
  %v50 = vunpack.c.l.bf16 %v38
  %v51 = vunpack.c.l.bf16 %v39
  %v52 = vunpack.c.l.bf16 %v40
  %v53 = vunpack.c.l.bf16 %v41
  %v54 = vunpack.c.l.bf16 %v42
  %v55 = vunpack.c.l.bf16 %v43
  %v56 = vunpack.c.l.bf16 %v44
  %v57 = vunpack.c.l.bf16 %v45
  %v58 = vunpack.c.l.bf16 %v46
  %v59 = vunpack.c.l.bf16 %v47
  %v72 = vunpack.c.l.b16 %v24
  %v73 = vunpack.c.l.b16 %v25
  %v74 = vunpack.c.l.b16 %v26
  %v75 = vunpack.c.l.b16 %v27
  %v76 = vunpack.c.l.b16 %v28
  %v77 = vunpack.c.l.b16 %v29
  %v78 = vunpack.c.l.b16 %v30
  %v79 = vunpack.c.l.b16 %v31
  %v80 = vunpack.c.l.b16 %v32
  %v81 = vunpack.c.l.b16 %v33
  %v82 = vunpack.c.l.b16 %v34
  %v83 = vunpack.c.l.b16 %v35
  %v84 = vpack.c.b16 %v73, %v72
  %v85 = vpack.c.b16 %v75, %v74
  %v86 = vpack.c.b16 %v77, %v76
  %v87 = vpack.c.b16 %v79, %v78
  %v88 = vpack.c.b16 %v81, %v80
  %v89 = vpack.c.b16 %v83, %v82
  %vm90 = vcmask 261120
  %v92 = vsel %vm90, %v84, 0
  %v95 = vsel %vm90, %v85, 0
  %v98 = vsel %vm90, %v86, 0
  %v101 = vsel %vm90, %v87, 0
  %v104 = vsel %vm90, %v88, 0
  %v107 = vsel %vm90, %v89, 0
  %109 = vmatprep.subr.bf16.mxu0 0
  %110 = vmatpush1.bf16.msra.mxu0 %v22
  %111 = vmatprep.subr.bf16.mxu0 0
  %112 = vmatpush1.bf16.msra.mxu0 %v23
  %113 = vmatprep.subr.bf16.mxu0 0
  %114 = vmatpush1.bf16.msra.mxu0 0
  %115 = vmatprep.subr.bf16.mxu0 0
  %116 = vmatpush1.bf16.msra.mxu0 0
  %117 = vmatprep.subr.bf16.mxu0 0
  %118 = vmatpush1.bf16.msra.mxu0 0
  %119 = vmatprep.subr.bf16.mxu0 0
  %120 = vmatpush1.bf16.msra.mxu0 0
  %121 = vmatprep.subr.bf16.mxu0 0
  %122 = vmatpush1.bf16.msra.mxu0 0
  %123 = vmatprep.subr.bf16.mxu0 0
  %124 = vmatpush1.bf16.msra.mxu0 0
  %125 = vmatprep.subr.bf16.mxu0 0
  %126 = vmatpush1.bf16.msra.mxu0 0
  %127 = vmatprep.subr.bf16.mxu0 0
  %128 = vmatpush1.bf16.msra.mxu0 0
  %129 = vmatprep.subr.bf16.mxu0 0
  %130 = vmatpush1.bf16.msra.mxu0 0
  %131 = vmatprep.subr.bf16.mxu0 0
  %132 = vmatpush1.bf16.msra.mxu0 0
  %133 = vmatprep.subr.bf16.mxu0 0
  %134 = vmatpush1.bf16.msra.mxu0 0
  %135 = vmatprep.subr.bf16.mxu0 0
  %136 = vmatpush1.bf16.msra.mxu0 0
  %137 = vmatprep.subr.bf16.mxu0 0
  %138 = vmatpush1.bf16.msra.mxu0 0
  %139 = vmatprep.subr.bf16.mxu0 0
  %140 = vmatpush1.bf16.msra.mxu0 0
  %141 = vmatprep.mubr.bf16.mxu0 0
  %142 = vmatmul.mubr.bf16.gmra.mrb[0].mxu0 %v92
  %v143 = vpop.f32.mrb[0].mxu0
  %v144 = vadd.f32 %v48, %v143
  %v145 = vpop.f32.mrb[0].mxu0
  %v146 = vpop.f32.mrb[0].mxu0
  %v147 = vadd.f32 %v49, %v146
  %v148 = vpop.f32.mrb[0].mxu0
  %149 = vmatprep.mubr.bf16.mxu0 0
  %150 = vmatmul.mubr.bf16.gmra.mrb[0].mxu0 %v95
  %v151 = vpop.f32.mrb[0].mxu0
  %v152 = vadd.f32 %v50, %v151
  %v153 = vpop.f32.mrb[0].mxu0
  %v154 = vpop.f32.mrb[0].mxu0
  %v155 = vadd.f32 %v51, %v154
  %v156 = vpop.f32.mrb[0].mxu0
  %157 = vmatprep.mubr.bf16.mxu0 0
  %158 = vmatmul.mubr.bf16.gmra.mrb[0].mxu0 %v98
  %v159 = vpop.f32.mrb[0].mxu0
  %v160 = vadd.f32 %v52, %v159
  %v161 = vpop.f32.mrb[0].mxu0
  %v162 = vpop.f32.mrb[0].mxu0
  %v163 = vadd.f32 %v53, %v162
  %v164 = vpop.f32.mrb[0].mxu0
  %165 = vmatprep.mubr.bf16.mxu0 0
  %166 = vmatmul.mubr.bf16.gmra.mrb[0].mxu0 %v101
  %v167 = vpop.f32.mrb[0].mxu0
  %v168 = vadd.f32 %v54, %v167
  %v169 = vpop.f32.mrb[0].mxu0
  %v170 = vpop.f32.mrb[0].mxu0
  %v171 = vadd.f32 %v55, %v170
  %v172 = vpop.f32.mrb[0].mxu0
  %173 = vmatprep.mubr.bf16.mxu0 0
  %174 = vmatmul.mubr.bf16.gmra.mrb[0].mxu0 %v104
  %v175 = vpop.f32.mrb[0].mxu0
  %v176 = vadd.f32 %v56, %v175
  %v177 = vpop.f32.mrb[0].mxu0
  %v178 = vpop.f32.mrb[0].mxu0
  %v179 = vadd.f32 %v57, %v178
  %v180 = vpop.f32.mrb[0].mxu0
  %181 = vmatprep.mubr.bf16.mxu0 0
  %182 = vmatmul.mubr.bf16.gmra.mrb[0].mxu0 %v107
  %v183 = vpop.f32.mrb[0].mxu0
  %v184 = vadd.f32 %v58, %v183
  %v185 = vpop.f32.mrb[0].mxu0
  %v186 = vpop.f32.mrb[0].mxu0
  %v187 = vadd.f32 %v59, %v186
  %v188 = vpop.f32.mrb[0].mxu0
  %189 = vdwg.mxu0
  %v190 = vmul.f32 %v144, 0.5
  %v191 = vmul.f32 %v147, 0.5
  %v192 = vmul.f32 %v152, 0.5
  %v193 = vmul.f32 %v155, 0.5
  %v194 = vtanh.pop %v190
  %v195 = vtanh.pop %v191
  %v196 = vtanh.pop %v192
  %v197 = vtanh.pop %v193
  %v198 = vadd.f32 %v194, 1.0
  %v199 = vadd.f32 %v195, 1.0
  %v200 = vadd.f32 %v196, 1.0
  %v201 = vadd.f32 %v197, 1.0
  %v202 = vmul.f32 %v198, 0.5
  %v203 = vmul.f32 %v199, 0.5
  %v204 = vmul.f32 %v200, 0.5
  %v205 = vmul.f32 %v201, 0.5
  %v206 = vmul.f32 %v160, 0.5
  %v207 = vmul.f32 %v163, 0.5
  %v208 = vmul.f32 %v168, 0.5
  %v209 = vmul.f32 %v171, 0.5
  %v210 = vtanh.pop %v206
  %v211 = vtanh.pop %v207
  %v212 = vtanh.pop %v208
  %v213 = vtanh.pop %v209
  %v214 = vadd.f32 %v210, 1.0
  %v215 = vadd.f32 %v211, 1.0
  %v216 = vadd.f32 %v212, 1.0
  %v217 = vadd.f32 %v213, 1.0
  %v218 = vmul.f32 %v214, 0.5
  %v219 = vmul.f32 %v215, 0.5
  %v220 = vmul.f32 %v216, 0.5
  %v221 = vmul.f32 %v217, 0.5
  %v222 = vmul.f32 %v218, %v18
  %v223 = vmul.f32 %v219, %v19
  %v224 = vmul.f32 %v220, %v20
  %v225 = vmul.f32 %v221, %v21
  %v226 = vpack.c.bf16 %v223, %v222
  %v227 = vpack.c.bf16 %v225, %v224
  %v228 = vld [vmem:[%s2] sm:$0xf]
  %v229 = vld [vmem:[%s2 + $0x4] sm:$0xf]
  %v230 = vld [vmem:[%s2 + $0x8] sm:$0xf]
  %v231 = vld [vmem:[%s2 + $0xc] sm:$0xf]
  %v236 = vunpack.c.l.b16 %v228
  %v237 = vunpack.c.l.b16 %v229
  %v238 = vunpack.c.l.b16 %v230
  %v239 = vunpack.c.l.b16 %v231
  %v240 = vpack.c.b16 %v237, %v236
  %v241 = vpack.c.b16 %v239, %v238
  %v243 = vsel %vm90, %v240, 0
  %v246 = vsel %vm90, %v241, 0
  %248 = vmatprep.subr.bf16.mxu0 0
  %249 = vmatpush1.bf16.msra.mxu0 %v226
  %250 = vmatprep.subr.bf16.mxu0 0
  %251 = vmatpush1.bf16.msra.mxu0 %v227
  %252 = vmatprep.subr.bf16.mxu0 0
  %253 = vmatpush1.bf16.msra.mxu0 0
  %254 = vmatprep.subr.bf16.mxu0 0
  %255 = vmatpush1.bf16.msra.mxu0 0
  %256 = vmatprep.subr.bf16.mxu0 0
  %257 = vmatpush1.bf16.msra.mxu0 0
  %258 = vmatprep.subr.bf16.mxu0 0
  %259 = vmatpush1.bf16.msra.mxu0 0
  %260 = vmatprep.subr.bf16.mxu0 0
  %261 = vmatpush1.bf16.msra.mxu0 0
  %262 = vmatprep.subr.bf16.mxu0 0
  %263 = vmatpush1.bf16.msra.mxu0 0
  %264 = vmatprep.subr.bf16.mxu0 0
  %265 = vmatpush1.bf16.msra.mxu0 0
  %266 = vmatprep.subr.bf16.mxu0 0
  %267 = vmatpush1.bf16.msra.mxu0 0
  %268 = vmatprep.subr.bf16.mxu0 0
  %269 = vmatpush1.bf16.msra.mxu0 0
  %270 = vmatprep.subr.bf16.mxu0 0
  %271 = vmatpush1.bf16.msra.mxu0 0
  %272 = vmatprep.subr.bf16.mxu0 0
  %273 = vmatpush1.bf16.msra.mxu0 0
  %274 = vmatprep.subr.bf16.mxu0 0
  %275 = vmatpush1.bf16.msra.mxu0 0
  %276 = vmatprep.subr.bf16.mxu0 0
  %277 = vmatpush1.bf16.msra.mxu0 0
  %278 = vmatprep.subr.bf16.mxu0 0
  %279 = vmatpush1.bf16.msra.mxu0 0
  %280 = vmatprep.mubr.bf16.mxu0 0
  %281 = vmatmul.mubr.bf16.gmra.mrb[0].mxu0 %v243
  %v282 = vpop.f32.mrb[0].mxu0
  %v283 = vadd.f32 0.0, %v282
  %v284 = vpop.f32.mrb[0].mxu0
  %v285 = vpop.f32.mrb[0].mxu0
  %v286 = vadd.f32 0.0, %v285
  %v287 = vpop.f32.mrb[0].mxu0
  %288 = vmatprep.mubr.bf16.mxu0 0
  %289 = vmatmul.mubr.bf16.gmra.mrb[0].mxu0 %v246
  %v290 = vpop.f32.mrb[0].mxu0
  %v291 = vadd.f32 0.0, %v290
  %v292 = vpop.f32.mrb[0].mxu0
  %v293 = vpop.f32.mrb[0].mxu0
  %v294 = vadd.f32 0.0, %v293
  %v295 = vpop.f32.mrb[0].mxu0
  %296 = vdwg.mxu0
  %v297 = vadd.f32 %v176, %v283
  %v298 = vadd.f32 %v179, %v286
  %v299 = vadd.f32 %v184, %v291
  %v300 = vadd.f32 %v187, %v294
  %v301 = vtanh.pop %v297
  %v302 = vtanh.pop %v298
  %v303 = vtanh.pop %v299
  %v304 = vtanh.pop %v300
  %v305 = vsub.f32 %v301, %v18
  %v306 = vsub.f32 %v302, %v19
  %v307 = vsub.f32 %v303, %v20
  %v308 = vsub.f32 %v304, %v21
  %v309 = vmul.f32 %v202, %v305
  %v310 = vmul.f32 %v203, %v306
  %v311 = vmul.f32 %v204, %v307
  %v312 = vmul.f32 %v205, %v308
  %v313 = vadd.f32 %v18, %v309
  %v314 = vadd.f32 %v19, %v310
  %v315 = vadd.f32 %v20, %v311
  %v316 = vadd.f32 %v21, %v312
  %317 = vst [vmem:[%s4] sm:$0xff] %v313
  %318 = vst [vmem:[%s4 + $0x8] sm:$0xff] %v314
  %319 = vst [vmem:[%s4 + $0x10] sm:$0xff] %v315
  %320 = vst [vmem:[%s4 + $0x18] sm:$0xff] %v316
  // Predicated region
  $region18: #{mat_gru_cell.1} parent=0 // pred_check
    _
  $region19: #{mat_gru_cell.1} parent=0 // pred_check_branch
    %322 = sbr.rel (0) target = $region21
  $region20: #{mat_gru_cell.1} parent=0 // pred_region
    _
  $region21: #{mat_gru_cell.1} parent=0 // pred_fallthru
    _
  // Predicated region
  $region22: #{mat_gru_cell.1} parent=0 // pred_check
    _
  $region23: #{mat_gru_cell.1} parent=0 // pred_check_branch
    %324 = sbr.rel (0) target = $region25
  $region24: #{mat_gru_cell.1} parent=0 // pred_region
    _
  $region25: #{mat_gru_cell.1} parent=0 // pred_fallthru
    _

</llo_original>
